<compile_context>
chip_gen: v5e
topology: v5e:2x2
jax: 0.10.0
libtpu: 0.0.40
codegen_flags: <defaults>
</compile_context>

<pallas_src>
import math

import jax
import jax.numpy as jnp
from jax.experimental import pallas as pl
from jax.experimental.pallas import tpu as pltpu


# ----------------------------------------------------------------------------
# Kernel
# ----------------------------------------------------------------------------
def _make_fusion_kernel(c_dim, w_dim, tb, row_chunk):
    """out[:, c*W:(c+1)*W] = coef[:, c:c+1] * slab[:, :], row-chunked.

    All indices are static, all output stores are W (>=128-multiple) lanes wide.
    """

    def kernel(coef_ref, slab_ref, o_ref):
        for r0 in range(0, tb, row_chunk):
            r1 = min(r0 + row_chunk, tb)
            slab = slab_ref[r0:r1, :]          # hoisted across the C iterations
            for c in range(c_dim):
                o_ref[r0:r1, c * w_dim:(c + 1) * w_dim] = (
                    coef_ref[r0:r1, c:c + 1] * slab
                )

    return kernel


# ----------------------------------------------------------------------------
# Tiling heuristics
# ----------------------------------------------------------------------------
def _sublane_multiple(itemsize):
    # Packed-sublane multiple: f32 -> 8, bf16/fp16 -> 16, int8/fp8 -> 32.
    return 8 * max(1, 4 // int(itemsize))


def _target_tile_bytes():
    """Per-generation output-tile target (Pallas double-buffers it)."""
    vmem = 128 << 20
    try:  # trace-time HW query; conservative fallback if unavailable
        info = pltpu.get_tpu_info()
        vmem = int(getattr(info, "vmem_capacity_bytes", vmem))
    except Exception:
        pass
    # v7x: only 64 MiB per TensorCore -> keep double-buffered output well clear.
    return (8 << 20) if vmem <= (80 << 20) else (12 << 20)


def _choose_batch_tile(batch, prod, itemsize, target_tile_bytes):
    sub = _sublane_multiple(itemsize)

    def rounded(r):
        return max(sub, (r // sub) * sub)

    tb = min(batch, max(1, target_tile_bytes // (prod * itemsize)))
    # Megacore (v7x): guarantee >= 2 grid steps (>= 4 while tiles stay >= 1 MiB)
    # so the "parallel" batch axis actually shards across both TensorCores.
    if batch >= 4 * sub and rounded(batch // 4) * prod * itemsize >= (1 << 20):
        tb = min(tb, rounded(batch // 4))
    elif batch >= 2 * sub:
        tb = min(tb, rounded(batch // 2))
    if tb < batch:
        tb = rounded(tb)  # partial blocks: keep sublane dim a packed multiple
    return tb


def _choose_row_chunk(tb, w_dim, itemsize, sub):
    # Keep the hoisted slab chunk <= ~64 KiB (~16 vregs): no spills, full-width
    # stores untouched.
    rows = max(1, (64 * 1024) // (w_dim * itemsize))
    rows = min(tb, rows)
    if rows < tb:
        rows = max(sub, (rows // sub) * sub)
    return rows


# ----------------------------------------------------------------------------
# Wrapper
# ----------------------------------------------------------------------------
def _flat_outer(a, b):
    """(B, Da), (B, Db) -> (B, Da*Db): flattened batched outer product."""
    return jnp.einsum("bi,bj->bij", a, b).reshape(a.shape[0], -1)


def tensor_fusion(xs):
    """Flattened batched tensor product of 2..4 (B, D_m) vectors.

    Matches torch.flatten(torch.einsum('bi,bj[,bk[,bl]]->...'), start_dim=1).
    """
    n = len(xs)
    if not (2 <= n <= 4):
        raise ValueError("Tensor product is only supported for 2 to 4 batch vectors.")
    batch = int(xs[0].shape[0])
    if any(int(x.shape[0]) != batch for x in xs):
        raise ValueError("All modalities must share the batch dimension.")
    dims = tuple(int(x.shape[1]) for x in xs)

    # einsum type-promotes mixed dtypes; mirror that explicitly.
    out_dtype = xs[0].dtype
    for x in xs[1:]:
        out_dtype = jnp.promote_types(out_dtype, x.dtype)
    xs = [x.astype(out_dtype) for x in xs]

    # Pre-materialize the finest fusion levels in the wrapper (tiny einsums) so
    # the kernel only performs levels whose store width is >= 128-lane multiple.
    if n == 2:
        # Nothing wide enough left for a kernel; pallas_call overhead would
        # dominate a (B, D0*D1) outer product -> let XLA handle it directly.
        return _flat_outer(xs[0], xs[1])
    if n == 3:
        coef = xs[0]                       # (B, D0)
        slab = _flat_outer(xs[1], xs[2])   # (B, D1*D2)
    else:  # n == 4
        coef = _flat_outer(xs[0], xs[1])   # (B, D0*D1)
        slab = _flat_outer(xs[2], xs[3])   # (B, D2*D3)

    c_dim = int(coef.shape[1])
    w_dim = int(slab.shape[1])
    prod = c_dim * w_dim
    assert prod == math.prod(dims)

    itemsize = jnp.dtype(out_dtype).itemsize
    sub = _sublane_multiple(itemsize)
    tb = _choose_batch_tile(batch, prod, itemsize, _target_tile_bytes())
    row_chunk = _choose_row_chunk(tb, w_dim, itemsize, sub)
    grid = (pl.cdiv(batch, tb),)

    # Double-buffered output + (tiny) inputs is all the VMEM this kernel needs.
    vmem_needed = 2 * tb * (prod + c_dim + w_dim) * itemsize + (1 << 20)
    vmem_limit = int(min(max(vmem_needed, 16 << 20), 48 << 20))

    cost = pl.CostEstimate(
        flops=batch * prod,  # ~one multiply per produced element
        transcendentals=0,
        bytes_accessed=batch * (prod + c_dim + w_dim) * itemsize,
    )

    return pl.pallas_call(
        _make_fusion_kernel(c_dim, w_dim, tb, row_chunk),
        out_shape=jax.ShapeDtypeStruct((batch, prod), out_dtype),
        grid=grid,
        in_specs=[
            pl.BlockSpec((tb, c_dim), lambda b: (b, 0)),
            pl.BlockSpec((tb, w_dim), lambda b: (b, 0)),
        ],
        out_specs=pl.BlockSpec((tb, prod), lambda b: (b, 0)),
        compiler_params=pltpu.CompilerParams(
            dimension_semantics=("parallel",),
            vmem_limit_bytes=vmem_limit,
        ),
        cost_estimate=cost,
    )(coef, slab)


class TensorFusionModel:
    """JAX/Pallas port of cpa._intense.TensorFusionModel (no parameters)."""

    def __init__(self, modality_indices, input_dim: int = 16):
        self.modality_indices = list(modality_indices)
        self.input_dim = input_dim

    def __call__(self, x: dict):
        tens_list_x = [x[index] for index in self.modality_indices]
        return tensor_fusion(tens_list_x)


# ----------------------------------------------------------------------------
# Reference & self-test
# ----------------------------------------------------------------------------
def _reference(xs):
    """Pure-JAX reference mirroring the torch.einsum branches."""
    if len(xs) == 2:
        t = jnp.einsum("bi,bj->bij", *xs)
    elif len(xs) == 3:
        t = jnp.einsum("bi,bj,bk->bijk", *xs)
    else:
        t = jnp.einsum("bi,bj,bk,bl->bijkl", *xs)
    return t.reshape(t.shape[0], -1)


if __name__ == "__main__":
    input_dim = 16

    # Primary case: module defaults (3 modalities, input_dim=16), batch=2.
    modalities = ["rna", "protein", "atac"]
    B = 2
    keys = jax.random.split(jax.random.PRNGKey(0), len(modalities))
    x = {
        name: jax.random.normal(k, (B, input_dim), dtype=jnp.float32)
        for name, k in zip(modalities, keys)
    }
    model = TensorFusionModel(modalities, input_dim=input_dim)
    out = jax.block_until_ready(model(x))
    ref = _reference([x[m] for m in modalities])
    assert out.shape == (B, input_dim ** len(modalities)), out.shape
    assert jnp.allclose(out, ref, atol=1e-5, rtol=1e-5)

    # Other branches: 2-modality (XLA fallback), 4-modality, and a ragged
    # multi-step batch-tiled 3-modality grid (megacore split + partial block).
    for names, bc in (
        (["a", "b"], 32),
        (["a", "b", "c", "d"], 24),
        (["a", "b", "c"], 20),
    ):
        ks = jax.random.split(jax.random.PRNGKey(1), len(names))
        xc = {
            nm: jax.random.normal(kk, (bc, input_dim), dtype=jnp.float32)
            for nm, kk in zip(names, ks)
        }
        outc = jax.block_until_ready(TensorFusionModel(names, input_dim)(xc))
        refc = _reference([xc[nm] for nm in names])
        assert outc.shape == refc.shape, (outc.shape, refc.shape)
        assert jnp.allclose(outc, refc, atol=1e-5, rtol=1e-5)

    print("KERNEL_OK")
</pallas_src>

<mosaic_0001>
module attributes {stable_mosaic.version = 11 : i64} {
  func.func @kernel(%arg0: i32, %arg1: memref<2x16xf32, #tpu.memory_space<vmem>>, %arg2: memref<2x256xf32, #tpu.memory_space<vmem>>, %arg3: memref<2x4096xf32, #tpu.memory_space<vmem>>) attributes {dimension_semantics = [#tpu.dimension_semantics<parallel>], iteration_bounds = array<i64: 1>, scalar_prefetch = 0 : i64, scratch_operands = 0 : i64, tpu.core_type = #tpu.core_type<tc>, window_params = [{transform_indices = @transform_0, window_bounds = array<i64: 2, 16>}, {transform_indices = @transform_1, window_bounds = array<i64: 2, 256>}, {transform_indices = @transform_2, window_bounds = array<i64: 2, 4096>}]} {
    %c0 = arith.constant 0 : index
    %c0_0 = arith.constant 0 : index
    %0 = vector.load %arg2[%c0, %c0_0] : memref<2x256xf32, #tpu.memory_space<vmem>>, vector<2x256xf32>
    %c0_1 = arith.constant 0 : index
    %c0_2 = arith.constant 0 : index
    %1 = vector.load %arg1[%c0_1, %c0_2] : memref<2x16xf32, #tpu.memory_space<vmem>>, vector<2x1xf32>
    %2 = vector.broadcast %1 : vector<2x1xf32> to vector<2x256xf32>
    %3 = arith.mulf %2, %0 : vector<2x256xf32>
    %c0_3 = arith.constant 0 : index
    %c0_4 = arith.constant 0 : index
    %4 = vector.load %arg3[%c0_3, %c0_4] : memref<2x4096xf32, #tpu.memory_space<vmem>>, vector<2x256xf32>
    tpu.vector_store %arg3[%c0_3, %c0_4], %3 {strides = array<i32>} : memref<2x4096xf32, #tpu.memory_space<vmem>>, vector<2x256xf32>,
    %c0_5 = arith.constant 0 : index
    %c1 = arith.constant 1 : index
    %5 = vector.load %arg1[%c0_5, %c1] : memref<2x16xf32, #tpu.memory_space<vmem>>, vector<2x1xf32>
    %6 = vector.broadcast %5 : vector<2x1xf32> to vector<2x256xf32>
    %7 = arith.mulf %6, %0 : vector<2x256xf32>
    %c0_6 = arith.constant 0 : index
    %c256 = arith.constant 256 : index
    %8 = vector.load %arg3[%c0_6, %c256] : memref<2x4096xf32, #tpu.memory_space<vmem>>, vector<2x256xf32>
    tpu.vector_store %arg3[%c0_6, %c256], %7 {strides = array<i32>} : memref<2x4096xf32, #tpu.memory_space<vmem>>, vector<2x256xf32>,
    %c0_7 = arith.constant 0 : index
    %c2 = arith.constant 2 : index
    %9 = vector.load %arg1[%c0_7, %c2] : memref<2x16xf32, #tpu.memory_space<vmem>>, vector<2x1xf32>
    %10 = vector.broadcast %9 : vector<2x1xf32> to vector<2x256xf32>
    %11 = arith.mulf %10, %0 : vector<2x256xf32>
    %c0_8 = arith.constant 0 : index
    %c512 = arith.constant 512 : index
    %12 = vector.load %arg3[%c0_8, %c512] : memref<2x4096xf32, #tpu.memory_space<vmem>>, vector<2x256xf32>
    tpu.vector_store %arg3[%c0_8, %c512], %11 {strides = array<i32>} : memref<2x4096xf32, #tpu.memory_space<vmem>>, vector<2x256xf32>,
    %c0_9 = arith.constant 0 : index
    %c3 = arith.constant 3 : index
    %13 = vector.load %arg1[%c0_9, %c3] : memref<2x16xf32, #tpu.memory_space<vmem>>, vector<2x1xf32>
    %14 = vector.broadcast %13 : vector<2x1xf32> to vector<2x256xf32>
    %15 = arith.mulf %14, %0 : vector<2x256xf32>
    %c0_10 = arith.constant 0 : index
    %c768 = arith.constant 768 : index
    %16 = vector.load %arg3[%c0_10, %c768] : memref<2x4096xf32, #tpu.memory_space<vmem>>, vector<2x256xf32>
    tpu.vector_store %arg3[%c0_10, %c768], %15 {strides = array<i32>} : memref<2x4096xf32, #tpu.memory_space<vmem>>, vector<2x256xf32>,
    %c0_11 = arith.constant 0 : index
    %c4 = arith.constant 4 : index
    %17 = vector.load %arg1[%c0_11, %c4] : memref<2x16xf32, #tpu.memory_space<vmem>>, vector<2x1xf32>
    %18 = vector.broadcast %17 : vector<2x1xf32> to vector<2x256xf32>
    %19 = arith.mulf %18, %0 : vector<2x256xf32>
    %c0_12 = arith.constant 0 : index
    %c1024 = arith.constant 1024 : index
    %20 = vector.load %arg3[%c0_12, %c1024] : memref<2x4096xf32, #tpu.memory_space<vmem>>, vector<2x256xf32>
    tpu.vector_store %arg3[%c0_12, %c1024], %19 {strides = array<i32>} : memref<2x4096xf32, #tpu.memory_space<vmem>>, vector<2x256xf32>,
    %c0_13 = arith.constant 0 : index
    %c5 = arith.constant 5 : index
    %21 = vector.load %arg1[%c0_13, %c5] : memref<2x16xf32, #tpu.memory_space<vmem>>, vector<2x1xf32>
    %22 = vector.broadcast %21 : vector<2x1xf32> to vector<2x256xf32>
    %23 = arith.mulf %22, %0 : vector<2x256xf32>
    %c0_14 = arith.constant 0 : index
    %c1280 = arith.constant 1280 : index
    %24 = vector.load %arg3[%c0_14, %c1280] : memref<2x4096xf32, #tpu.memory_space<vmem>>, vector<2x256xf32>
    tpu.vector_store %arg3[%c0_14, %c1280], %23 {strides = array<i32>} : memref<2x4096xf32, #tpu.memory_space<vmem>>, vector<2x256xf32>,
    %c0_15 = arith.constant 0 : index
    %c6 = arith.constant 6 : index
    %25 = vector.load %arg1[%c0_15, %c6] : memref<2x16xf32, #tpu.memory_space<vmem>>, vector<2x1xf32>
    %26 = vector.broadcast %25 : vector<2x1xf32> to vector<2x256xf32>
    %27 = arith.mulf %26, %0 : vector<2x256xf32>
    %c0_16 = arith.constant 0 : index
    %c1536 = arith.constant 1536 : index
    %28 = vector.load %arg3[%c0_16, %c1536] : memref<2x4096xf32, #tpu.memory_space<vmem>>, vector<2x256xf32>
    tpu.vector_store %arg3[%c0_16, %c1536], %27 {strides = array<i32>} : memref<2x4096xf32, #tpu.memory_space<vmem>>, vector<2x256xf32>,
    %c0_17 = arith.constant 0 : index
    %c7 = arith.constant 7 : index
    %29 = vector.load %arg1[%c0_17, %c7] : memref<2x16xf32, #tpu.memory_space<vmem>>, vector<2x1xf32>
    %30 = vector.broadcast %29 : vector<2x1xf32> to vector<2x256xf32>
    %31 = arith.mulf %30, %0 : vector<2x256xf32>
    %c0_18 = arith.constant 0 : index
    %c1792 = arith.constant 1792 : index
    %32 = vector.load %arg3[%c0_18, %c1792] : memref<2x4096xf32, #tpu.memory_space<vmem>>, vector<2x256xf32>
    tpu.vector_store %arg3[%c0_18, %c1792], %31 {strides = array<i32>} : memref<2x4096xf32, #tpu.memory_space<vmem>>, vector<2x256xf32>,
    %c0_19 = arith.constant 0 : index
    %c8 = arith.constant 8 : index
    %33 = vector.load %arg1[%c0_19, %c8] : memref<2x16xf32, #tpu.memory_space<vmem>>, vector<2x1xf32>
    %34 = vector.broadcast %33 : vector<2x1xf32> to vector<2x256xf32>
    %35 = arith.mulf %34, %0 : vector<2x256xf32>
    %c0_20 = arith.constant 0 : index
    %c2048 = arith.constant 2048 : index
    %36 = vector.load %arg3[%c0_20, %c2048] : memref<2x4096xf32, #tpu.memory_space<vmem>>, vector<2x256xf32>
    tpu.vector_store %arg3[%c0_20, %c2048], %35 {strides = array<i32>} : memref<2x4096xf32, #tpu.memory_space<vmem>>, vector<2x256xf32>,
    %c0_21 = arith.constant 0 : index
    %c9 = arith.constant 9 : index
    %37 = vector.load %arg1[%c0_21, %c9] : memref<2x16xf32, #tpu.memory_space<vmem>>, vector<2x1xf32>
    %38 = vector.broadcast %37 : vector<2x1xf32> to vector<2x256xf32>
    %39 = arith.mulf %38, %0 : vector<2x256xf32>
    %c0_22 = arith.constant 0 : index
    %c2304 = arith.constant 2304 : index
    %40 = vector.load %arg3[%c0_22, %c2304] : memref<2x4096xf32, #tpu.memory_space<vmem>>, vector<2x256xf32>
    tpu.vector_store %arg3[%c0_22, %c2304], %39 {strides = array<i32>} : memref<2x4096xf32, #tpu.memory_space<vmem>>, vector<2x256xf32>,
    %c0_23 = arith.constant 0 : index
    %c10 = arith.constant 10 : index
    %41 = vector.load %arg1[%c0_23, %c10] : memref<2x16xf32, #tpu.memory_space<vmem>>, vector<2x1xf32>
    %42 = vector.broadcast %41 : vector<2x1xf32> to vector<2x256xf32>
    %43 = arith.mulf %42, %0 : vector<2x256xf32>
    %c0_24 = arith.constant 0 : index
    %c2560 = arith.constant 2560 : index
    %44 = vector.load %arg3[%c0_24, %c2560] : memref<2x4096xf32, #tpu.memory_space<vmem>>, vector<2x256xf32>
    tpu.vector_store %arg3[%c0_24, %c2560], %43 {strides = array<i32>} : memref<2x4096xf32, #tpu.memory_space<vmem>>, vector<2x256xf32>,
    %c0_25 = arith.constant 0 : index
    %c11 = arith.constant 11 : index
    %45 = vector.load %arg1[%c0_25, %c11] : memref<2x16xf32, #tpu.memory_space<vmem>>, vector<2x1xf32>
    %46 = vector.broadcast %45 : vector<2x1xf32> to vector<2x256xf32>
    %47 = arith.mulf %46, %0 : vector<2x256xf32>
    %c0_26 = arith.constant 0 : index
    %c2816 = arith.constant 2816 : index
    %48 = vector.load %arg3[%c0_26, %c2816] : memref<2x4096xf32, #tpu.memory_space<vmem>>, vector<2x256xf32>
    tpu.vector_store %arg3[%c0_26, %c2816], %47 {strides = array<i32>} : memref<2x4096xf32, #tpu.memory_space<vmem>>, vector<2x256xf32>,
    %c0_27 = arith.constant 0 : index
    %c12 = arith.constant 12 : index
    %49 = vector.load %arg1[%c0_27, %c12] : memref<2x16xf32, #tpu.memory_space<vmem>>, vector<2x1xf32>
    %50 = vector.broadcast %49 : vector<2x1xf32> to vector<2x256xf32>
    %51 = arith.mulf %50, %0 : vector<2x256xf32>
    %c0_28 = arith.constant 0 : index
    %c3072 = arith.constant 3072 : index
    %52 = vector.load %arg3[%c0_28, %c3072] : memref<2x4096xf32, #tpu.memory_space<vmem>>, vector<2x256xf32>
    tpu.vector_store %arg3[%c0_28, %c3072], %51 {strides = array<i32>} : memref<2x4096xf32, #tpu.memory_space<vmem>>, vector<2x256xf32>,
    %c0_29 = arith.constant 0 : index
    %c13 = arith.constant 13 : index
    %53 = vector.load %arg1[%c0_29, %c13] : memref<2x16xf32, #tpu.memory_space<vmem>>, vector<2x1xf32>
    %54 = vector.broadcast %53 : vector<2x1xf32> to vector<2x256xf32>
    %55 = arith.mulf %54, %0 : vector<2x256xf32>
    %c0_30 = arith.constant 0 : index
    %c3328 = arith.constant 3328 : index
    %56 = vector.load %arg3[%c0_30, %c3328] : memref<2x4096xf32, #tpu.memory_space<vmem>>, vector<2x256xf32>
    tpu.vector_store %arg3[%c0_30, %c3328], %55 {strides = array<i32>} : memref<2x4096xf32, #tpu.memory_space<vmem>>, vector<2x256xf32>,
    %c0_31 = arith.constant 0 : index
    %c14 = arith.constant 14 : index
    %57 = vector.load %arg1[%c0_31, %c14] : memref<2x16xf32, #tpu.memory_space<vmem>>, vector<2x1xf32>
    %58 = vector.broadcast %57 : vector<2x1xf32> to vector<2x256xf32>
    %59 = arith.mulf %58, %0 : vector<2x256xf32>
    %c0_32 = arith.constant 0 : index
    %c3584 = arith.constant 3584 : index
    %60 = vector.load %arg3[%c0_32, %c3584] : memref<2x4096xf32, #tpu.memory_space<vmem>>, vector<2x256xf32>
    tpu.vector_store %arg3[%c0_32, %c3584], %59 {strides = array<i32>} : memref<2x4096xf32, #tpu.memory_space<vmem>>, vector<2x256xf32>,
    %c0_33 = arith.constant 0 : index
    %c15 = arith.constant 15 : index
    %61 = vector.load %arg1[%c0_33, %c15] : memref<2x16xf32, #tpu.memory_space<vmem>>, vector<2x1xf32>
    %62 = vector.broadcast %61 : vector<2x1xf32> to vector<2x256xf32>
    %63 = arith.mulf %62, %0 : vector<2x256xf32>
    %c0_34 = arith.constant 0 : index
    %c3840 = arith.constant 3840 : index
    %64 = vector.load %arg3[%c0_34, %c3840] : memref<2x4096xf32, #tpu.memory_space<vmem>>, vector<2x256xf32>
    tpu.vector_store %arg3[%c0_34, %c3840], %63 {strides = array<i32>} : memref<2x4096xf32, #tpu.memory_space<vmem>>, vector<2x256xf32>,
    return
  }
  func.func @transform_0(%arg0: i32) -> (i32, i32) {
    %c0_i32 = arith.constant 0 : i32
    %c0_i32_0 = arith.constant 0 : i32
    return %arg0, %c0_i32 : i32, i32
  }
  func.func @transform_1(%arg0: i32) -> (i32, i32) {
    %c0_i32 = arith.constant 0 : i32
    %c0_i32_0 = arith.constant 0 : i32
    return %arg0, %c0_i32 : i32, i32
  }
  func.func @transform_2(%arg0: i32) -> (i32, i32) {
    %c0_i32 = arith.constant 0 : i32
    %c0_i32_0 = arith.constant 0 : i32
    return %arg0, %c0_i32 : i32, i32
  }
}

</mosaic_0001>

<llo_original>
// kernel: tpu_custom_call.1
$region0: #{tpu_custom_call.1}
  #allocation0 [shape = 'u32[]', space=smem, size = 0x4, offset = 0x4, fixed_abs, tag = 'smem constant byte address 0x4 - core index']
  #allocation1 [shape = 'u32[72,128]{1,0:T(1,128)}', space=vmem, size = 0x9000, scoped, tag = 'internal scratch']
  %s0 = inlined_call_operand.hbm [shape: f32[2,16], index: 0, kind: input, shape index: {}]
  %s1 = inlined_call_operand.hbm [shape: f32[2,256], index: 1, kind: input, shape index: {}]
  %s2 = inlined_call_operand.hbm [shape: f32[2,4096], index: 2, kind: output, shape index: {}]
  %s3 = sld [smem:[#allocation0]]
  $region26: #{tpu_custom_call.1} parent=0
    _
  %s5 = ssub.s32 1, %s3
  %s6 = scalar_select 0, %s5, %s3
  $region1: #{tpu_custom_call.1} parent=0
    #allocation2 [shape = 'u8[1024]{0}', space=vmem, size = 0x400, scoped, tag = 'input window, operand 0, single buffered']
    #allocation3 [shape = 's32[1]{0}', space=sflag, size = 0x4, scoped, tag = 'scoped memory for tpu_custom_call.1']
    #allocation4 [shape = 's32[1]{0}', space=sflag, size = 0x4, scoped, tag = 'scoped memory for tpu_custom_call.1']
    #allocation5 [shape = 'u8[2048]{0}', space=vmem, size = 0x800, scoped, tag = 'input window, operand 1, single buffered']
    #allocation6 [shape = 's32[1]{0}', space=sflag, size = 0x4, scoped, tag = 'scoped memory for tpu_custom_call.1']
    #allocation7 [shape = 'u8[32768]{0}', space=vmem, size = 0x8000, scoped, tag = 'output window, operand 0, single buffered']
    %7 = vsyncpa [#allocation3], 0
    %8 = vsyncpa [#allocation6], 0
    %9 = vsyncpa [#allocation4], 0
    // Predicated region
    $region2: #{tpu_custom_call.1} parent=1 // pred_check
      _
    $region3: #{tpu_custom_call.1} parent=1 // pred_check_branch
      %11 = sbr.rel (0) target = $region5
    $region4: #{tpu_custom_call.1} parent=1 // pred_region
      %13 = vsyncadd [#allocation3], 0
      %s15 = sshll.u32 %s0, 4
      %s16 = int_to_ptr.hbm [resolvable:$true] %s15
      %s17 = sshll.u32 [#allocation2], 4
      %s18 = int_to_ptr.vmem [resolvable:$true] %s17
      %20 = dma.hbm_to_vmem [thread:$0]  %s16, 32, %s18, [#allocation3]
    $region5: #{tpu_custom_call.1} parent=1 // pred_fallthru
      _
    // Predicated region
    $region6: #{tpu_custom_call.1} parent=1 // pred_check
      _
    $region7: #{tpu_custom_call.1} parent=1 // pred_check_branch
      %22 = sbr.rel (0) target = $region9
    $region8: #{tpu_custom_call.1} parent=1 // pred_region
      %24 = vsyncadd [#allocation6], 0
      %s26 = sshll.u32 %s1, 4
      %s27 = int_to_ptr.hbm [resolvable:$true] %s26
      %s28 = sshll.u32 [#allocation5], 4
      %s29 = int_to_ptr.vmem [resolvable:$true] %s28
      %31 = dma.hbm_to_vmem [thread:$0]  %s27, 64, %s29, [#allocation6]
    $region9: #{tpu_custom_call.1} parent=1 // pred_fallthru
      _
    // Predicated region
    $region10: #{tpu_custom_call.1} parent=1 // pred_check
      _
    $region11: #{tpu_custom_call.1} parent=1 // pred_check_branch
      %33 = sbr.rel (0) target = $region13
    $region12: #{tpu_custom_call.1} parent=1 // pred_region
      %35 = dma.done [#allocation3], 32
    $region13: #{tpu_custom_call.1} parent=1 // pred_fallthru
      _
    // Predicated region
    $region14: #{tpu_custom_call.1} parent=1 // pred_check
      _
    $region15: #{tpu_custom_call.1} parent=1 // pred_check_branch
      %37 = sbr.rel (0) target = $region17
    $region16: #{tpu_custom_call.1} parent=1 // pred_region
      %39 = dma.done [#allocation6], 64
    $region17: #{tpu_custom_call.1} parent=1 // pred_fallthru
      _
    %v40 = vld [vmem:[#allocation5] sm:$0xf]
    %v41 = vld [vmem:[#allocation2] sm:$0x3]
    %43 = vset.pattern.permute.xlu0 0
    %44 = vperm.xlu0 %43, %v41
    %v45 = vpop.permute.xlu0 %44
    %48 = vst [vmem:[#allocation1] ss:$4 sm:$0xff] %v40
    %v49 = vld.sshfl [vmem:[#allocation1] sm:$0xff pattern:$0x73625140]
    %v50 = vld.sshfl [vmem:[#allocation1 + $0x8] sm:$0xff pattern:$0x73625140]
    %v53 = vmul.f32 %v45, %v49
    %v54 = vmul.f32 %v45, %v50
    %v57 = vrot.slane %v54, 6
    %vm58 = vcmask 1041408
    %v59 = vsel %vm58, %v53, %v57
    %61 = vst [vmem:[#allocation7] sm:$0xf] %v59
    %v62 = vld [vmem:[#allocation2] sm:$0x3]
    %64 = vset.pattern.permute.xlu0 1
    %65 = vperm.xlu0 %64, %v62
    %v66 = vpop.permute.xlu0 %65
    %68 = vst [vmem:[#allocation1] ss:$4 sm:$0xff] %v40
    %v69 = vld.sshfl [vmem:[#allocation1] sm:$0xff pattern:$0x73625140]
    %v70 = vld.sshfl [vmem:[#allocation1 + $0x8] sm:$0xff pattern:$0x73625140]
    %v73 = vmul.f32 %v66, %v69
    %v74 = vmul.f32 %v66, %v70
    %v77 = vrot.slane %v74, 6
    %v78 = vsel %vm58, %v73, %v77
    %80 = vst [vmem:[#allocation7 + $0x4] sm:$0xf] %v78
    %v81 = vld [vmem:[#allocation2] sm:$0x3]
    %83 = vset.pattern.permute.xlu0 2
    %84 = vperm.xlu0 %83, %v81
    %v85 = vpop.permute.xlu0 %84
    %87 = vst [vmem:[#allocation1] ss:$4 sm:$0xff] %v40
    %v88 = vld.sshfl [vmem:[#allocation1] sm:$0xff pattern:$0x73625140]
    %v89 = vld.sshfl [vmem:[#allocation1 + $0x8] sm:$0xff pattern:$0x73625140]
    %v92 = vmul.f32 %v85, %v88
    %v93 = vmul.f32 %v85, %v89
    %v96 = vrot.slane %v93, 6
    %v97 = vsel %vm58, %v92, %v96
    %99 = vst [vmem:[#allocation7 + $0x8] sm:$0xf] %v97
    %v100 = vld [vmem:[#allocation2] sm:$0x3]
    %102 = vset.pattern.permute.xlu0 3
    %103 = vperm.xlu0 %102, %v100
    %v104 = vpop.permute.xlu0 %103
    %106 = vst [vmem:[#allocation1] ss:$4 sm:$0xff] %v40
    %v107 = vld.sshfl [vmem:[#allocation1] sm:$0xff pattern:$0x73625140]
    %v108 = vld.sshfl [vmem:[#allocation1 + $0x8] sm:$0xff pattern:$0x73625140]
    %v111 = vmul.f32 %v104, %v107
    %v112 = vmul.f32 %v104, %v108
    %v115 = vrot.slane %v112, 6
    %v116 = vsel %vm58, %v111, %v115
    %118 = vst [vmem:[#allocation7 + $0xc] sm:$0xf] %v116
    %v119 = vld [vmem:[#allocation2] sm:$0x3]
    %121 = vset.pattern.permute.xlu0 4
    %122 = vperm.xlu0 %121, %v119
    %v123 = vpop.permute.xlu0 %122
    %125 = vst [vmem:[#allocation1] ss:$4 sm:$0xff] %v40
    %v126 = vld.sshfl [vmem:[#allocation1] sm:$0xff pattern:$0x73625140]
    %v127 = vld.sshfl [vmem:[#allocation1 + $0x8] sm:$0xff pattern:$0x73625140]
    %v130 = vmul.f32 %v123, %v126
    %v131 = vmul.f32 %v123, %v127
    %v134 = vrot.slane %v131, 6
    %v135 = vsel %vm58, %v130, %v134
    %137 = vst [vmem:[#allocation7 + $0x10] sm:$0xf] %v135
    %v138 = vld [vmem:[#allocation2] sm:$0x3]
    %140 = vset.pattern.permute.xlu0 5
    %141 = vperm.xlu0 %140, %v138
    %v142 = vpop.permute.xlu0 %141
    %144 = vst [vmem:[#allocation1] ss:$4 sm:$0xff] %v40
    %v145 = vld.sshfl [vmem:[#allocation1] sm:$0xff pattern:$0x73625140]
    %v146 = vld.sshfl [vmem:[#allocation1 + $0x8] sm:$0xff pattern:$0x73625140]
    %v149 = vmul.f32 %v142, %v145
    %v150 = vmul.f32 %v142, %v146
    %v153 = vrot.slane %v150, 6
    %v154 = vsel %vm58, %v149, %v153
    %156 = vst [vmem:[#allocation7 + $0x14] sm:$0xf] %v154
    %v157 = vld [vmem:[#allocation2] sm:$0x3]
    %159 = vset.pattern.permute.xlu0 6
    %160 = vperm.xlu0 %159, %v157
    %v161 = vpop.permute.xlu0 %160
    %163 = vst [vmem:[#allocation1] ss:$4 sm:$0xff] %v40
    %v164 = vld.sshfl [vmem:[#allocation1] sm:$0xff pattern:$0x73625140]
    %v165 = vld.sshfl [vmem:[#allocation1 + $0x8] sm:$0xff pattern:$0x73625140]
    %v168 = vmul.f32 %v161, %v164
    %v169 = vmul.f32 %v161, %v165
    %v172 = vrot.slane %v169, 6
    %v173 = vsel %vm58, %v168, %v172
    %175 = vst [vmem:[#allocation7 + $0x18] sm:$0xf] %v173
    %v176 = vld [vmem:[#allocation2] sm:$0x3]
    %178 = vset.pattern.permute.xlu0 7
    %179 = vperm.xlu0 %178, %v176
    %v180 = vpop.permute.xlu0 %179
    %182 = vst [vmem:[#allocation1] ss:$4 sm:$0xff] %v40
    %v183 = vld.sshfl [vmem:[#allocation1] sm:$0xff pattern:$0x73625140]
    %v184 = vld.sshfl [vmem:[#allocation1 + $0x8] sm:$0xff pattern:$0x73625140]
    %v187 = vmul.f32 %v180, %v183
    %v188 = vmul.f32 %v180, %v184
    %v191 = vrot.slane %v188, 6
    %v192 = vsel %vm58, %v187, %v191
    %194 = vst [vmem:[#allocation7 + $0x1c] sm:$0xf] %v192
    %v195 = vld [vmem:[#allocation2] sm:$0x3]
    %197 = vset.pattern.permute.xlu0 8
    %198 = vperm.xlu0 %197, %v195
    %v199 = vpop.permute.xlu0 %198
    %201 = vst [vmem:[#allocation1] ss:$4 sm:$0xff] %v40
    %v202 = vld.sshfl [vmem:[#allocation1] sm:$0xff pattern:$0x73625140]
    %v203 = vld.sshfl [vmem:[#allocation1 + $0x8] sm:$0xff pattern:$0x73625140]
    %v206 = vmul.f32 %v199, %v202
    %v207 = vmul.f32 %v199, %v203
    %v210 = vrot.slane %v207, 6
    %v211 = vsel %vm58, %v206, %v210
    %213 = vst [vmem:[#allocation7 + $0x20] sm:$0xf] %v211
    %v214 = vld [vmem:[#allocation2] sm:$0x3]
    %216 = vset.pattern.permute.xlu0 9
    %217 = vperm.xlu0 %216, %v214
    %v218 = vpop.permute.xlu0 %217
    %220 = vst [vmem:[#allocation1] ss:$4 sm:$0xff] %v40
    %v221 = vld.sshfl [vmem:[#allocation1] sm:$0xff pattern:$0x73625140]
    %v222 = vld.sshfl [vmem:[#allocation1 + $0x8] sm:$0xff pattern:$0x73625140]
    %v225 = vmul.f32 %v218, %v221
    %v226 = vmul.f32 %v218, %v222
    %v229 = vrot.slane %v226, 6
    %v230 = vsel %vm58, %v225, %v229
    %232 = vst [vmem:[#allocation7 + $0x24] sm:$0xf] %v230
    %v233 = vld [vmem:[#allocation2] sm:$0x3]
    %235 = vset.pattern.permute.xlu0 10
    %236 = vperm.xlu0 %235, %v233
    %v237 = vpop.permute.xlu0 %236
    %239 = vst [vmem:[#allocation1] ss:$4 sm:$0xff] %v40
    %v240 = vld.sshfl [vmem:[#allocation1] sm:$0xff pattern:$0x73625140]
    %v241 = vld.sshfl [vmem:[#allocation1 + $0x8] sm:$0xff pattern:$0x73625140]
    %v244 = vmul.f32 %v237, %v240
    %v245 = vmul.f32 %v237, %v241
    %v248 = vrot.slane %v245, 6
    %v249 = vsel %vm58, %v244, %v248
    %251 = vst [vmem:[#allocation7 + $0x28] sm:$0xf] %v249
    %v252 = vld [vmem:[#allocation2] sm:$0x3]
    %254 = vset.pattern.permute.xlu0 11
    %255 = vperm.xlu0 %254, %v252
    %v256 = vpop.permute.xlu0 %255
    %258 = vst [vmem:[#allocation1] ss:$4 sm:$0xff] %v40
    %v259 = vld.sshfl [vmem:[#allocation1] sm:$0xff pattern:$0x73625140]
    %v260 = vld.sshfl [vmem:[#allocation1 + $0x8] sm:$0xff pattern:$0x73625140]
    %v263 = vmul.f32 %v256, %v259
    %v264 = vmul.f32 %v256, %v260
    %v267 = vrot.slane %v264, 6
    %v268 = vsel %vm58, %v263, %v267
    %270 = vst [vmem:[#allocation7 + $0x2c] sm:$0xf] %v268
    %v271 = vld [vmem:[#allocation2] sm:$0x3]
    %273 = vset.pattern.permute.xlu0 12
    %274 = vperm.xlu0 %273, %v271
    %v275 = vpop.permute.xlu0 %274
    %277 = vst [vmem:[#allocation1] ss:$4 sm:$0xff] %v40
    %v278 = vld.sshfl [vmem:[#allocation1] sm:$0xff pattern:$0x73625140]
    %v279 = vld.sshfl [vmem:[#allocation1 + $0x8] sm:$0xff pattern:$0x73625140]
    %v282 = vmul.f32 %v275, %v278
    %v283 = vmul.f32 %v275, %v279
    %v286 = vrot.slane %v283, 6
    %v287 = vsel %vm58, %v282, %v286
    %289 = vst [vmem:[#allocation7 + $0x30] sm:$0xf] %v287
    %v290 = vld [vmem:[#allocation2] sm:$0x3]
    %292 = vset.pattern.permute.xlu0 13
    %293 = vperm.xlu0 %292, %v290
    %v294 = vpop.permute.xlu0 %293
    %296 = vst [vmem:[#allocation1] ss:$4 sm:$0xff] %v40
    %v297 = vld.sshfl [vmem:[#allocation1] sm:$0xff pattern:$0x73625140]
    %v298 = vld.sshfl [vmem:[#allocation1 + $0x8] sm:$0xff pattern:$0x73625140]
    %v301 = vmul.f32 %v294, %v297
    %v302 = vmul.f32 %v294, %v298
    %v305 = vrot.slane %v302, 6
    %v306 = vsel %vm58, %v301, %v305
    %308 = vst [vmem:[#allocation7 + $0x34] sm:$0xf] %v306
    %v309 = vld [vmem:[#allocation2] sm:$0x3]
    %311 = vset.pattern.permute.xlu0 14
    %312 = vperm.xlu0 %311, %v309
    %v313 = vpop.permute.xlu0 %312
    %315 = vst [vmem:[#allocation1] ss:$4 sm:$0xff] %v40
    %v316 = vld.sshfl [vmem:[#allocation1] sm:$0xff pattern:$0x73625140]
    %v317 = vld.sshfl [vmem:[#allocation1 + $0x8] sm:$0xff pattern:$0x73625140]
    %v320 = vmul.f32 %v313, %v316
    %v321 = vmul.f32 %v313, %v317
    %v324 = vrot.slane %v321, 6
    %v325 = vsel %vm58, %v320, %v324
    %327 = vst [vmem:[#allocation7 + $0x38] sm:$0xf] %v325
    %v328 = vld [vmem:[#allocation2] sm:$0x3]
    %330 = vset.pattern.permute.xlu0 15
    %331 = vperm.xlu0 %330, %v328
    %v332 = vpop.permute.xlu0 %331
    %334 = vst [vmem:[#allocation1] ss:$4 sm:$0xff] %v40
    %v335 = vld.sshfl [vmem:[#allocation1] sm:$0xff pattern:$0x73625140]
    %v336 = vld.sshfl [vmem:[#allocation1 + $0x8] sm:$0xff pattern:$0x73625140]
    %v339 = vmul.f32 %v332, %v335
    %v340 = vmul.f32 %v332, %v336
    %v343 = vrot.slane %v340, 6
    %v344 = vsel %vm58, %v339, %v343
    %346 = vst [vmem:[#allocation7 + $0x3c] sm:$0xf] %v344
    // Predicated region
    $region18: #{tpu_custom_call.1} parent=1 // pred_check
      _
    $region19: #{tpu_custom_call.1} parent=1 // pred_check_branch
      %348 = sbr.rel (0) target = $region21
    $region20: #{tpu_custom_call.1} parent=1 // pred_region
      %350 = vsyncadd [#allocation4], 0
      %s352 = sshll.u32 [#allocation7], 4
      %s353 = int_to_ptr.vmem [resolvable:$true] %s352
      %s354 = sshll.u32 %s2, 4
      %s355 = int_to_ptr.hbm [resolvable:$true] %s354
      %357 = dma.vmem_to_hbm [thread:$0]  %s353, 1024, %s355, [#allocation4]
    $region21: #{tpu_custom_call.1} parent=1 // pred_fallthru
      _
    // Predicated region
    $region22: #{tpu_custom_call.1} parent=1 // pred_check
      _
    $region23: #{tpu_custom_call.1} parent=1 // pred_check_branch
      %359 = sbr.rel (0) target = $region25
    $region24: #{tpu_custom_call.1} parent=1 // pred_region
      %361 = dma.done [#allocation4], 1024
    $region25: #{tpu_custom_call.1} parent=1 // pred_fallthru
      _
    %362 = vsyncpa [#allocation3], 1
    %363 = vsyncpa [#allocation6], 1
    %364 = vsyncpa [#allocation4], 1

</llo_original>
